<compile_context>
chip_gen: v5e
topology: v5e:2x2
jax: 0.10.0
libtpu: 0.0.40
codegen_flags: <defaults>
</compile_context>

<pallas_src>
import jax
import jax.numpy as jnp
from jax.experimental import pallas as pl
from jax.experimental.pallas import tpu as pltpu


def _spatial_attn_kernel_fused(x_ref, o_ref):
    # x_ref: (TB, C, HWp) whole-channel block for TB batch samples.
    # o_ref: (TB, 1, HWp) normalized channel-mean maps.
    # Widening cast fused into the reduction (no materialized f32 copy).
    acc = jnp.sum(x_ref[...], axis=1, keepdims=True, dtype=jnp.float32)  # (TB,1,HWp)
    s = jnp.sum(acc, axis=-1, keepdims=True)                             # (TB,1,1)
    # Exact reciprocal (approx=True's ~2^-12 error could exceed 1e-5 tol).
    inv = pl.reciprocal(s, approx=False)
    o_ref[...] = (acc * inv).astype(o_ref.dtype)                         # lane-dense store


def _spatial_attn_kernel_chunked(x_ref, o_ref, acc_ref):
    # x_ref:   (1, TC, HWp) channel-chunk of the current batch element.
    # o_ref:   (1, 1, HWp)  output, written once at the last chunk.
    # acc_ref: (1, 1, HWp)  f32 accumulator, resident across the channel axis.
    k = pl.program_id(1)

    @pl.when(k == 0)
    def _init():
        acc_ref[...] = jnp.zeros_like(acc_ref)

    # Sum over the channel chunk with the cast fused into the reduction.
    acc_ref[...] += jnp.sum(x_ref[...], axis=1, keepdims=True, dtype=jnp.float32)

    @pl.when(k == pl.num_programs(1) - 1)
    def _finalize():
        a = acc_ref[...]                               # (1, 1, HWp) f32
        s = jnp.sum(a, axis=-1, keepdims=True)         # (1, 1, 1) spatial sum
        inv = pl.reciprocal(s, approx=False)
        o_ref[...] = (a * inv).astype(o_ref.dtype)     # single lane-dense store


def _round_up(n, m):
    return -(-n // m) * m


def spatial_attn(x, *, budget_bytes=4 << 20):
    """x: (B, C, H, W) -> (B, 1, H, W); each sample's map sums to 1."""
    B, C, H, W = x.shape
    HW = H * W
    HWp = _round_up(HW, 128)          # lane-dense, unmasked vld/vst
    itemsize = x.dtype.itemsize

    xf = x.reshape(B, C, HW)          # metadata-only reshape -> lane axis = HW
    if HWp != HW:
        xf = jnp.pad(xf, ((0, 0), (0, 0), (0, HWp - HW)))  # zeros are sum-neutral

    per_sample = C * HWp * itemsize
    vmem_params = pltpu.CompilerParams  # alias for brevity below

    if per_sample <= budget_bytes:
        # ---- Fused path: whole C in one chunk, batch TB samples per step. ----
        tb_max = max(1, budget_bytes // per_sample)
        # Keep >= 2 iterations on the parallel axis when B >= 2 (v7x megacore).
        tb_cap = min(tb_max, B) if B < 2 else min(tb_max, max(1, B // 2))
        tb = 1
        for d in range(tb_cap, 0, -1):
            if B % d == 0:
                tb = d
                break

        out_flat = pl.pallas_call(
            _spatial_attn_kernel_fused,
            out_shape=jax.ShapeDtypeStruct((B, 1, HWp), x.dtype),
            grid_spec=pltpu.PrefetchScalarGridSpec(
                num_scalar_prefetch=0,
                grid=(B // tb,),
                in_specs=[pl.BlockSpec((tb, C, HWp), lambda i: (i, 0, 0))],
                out_specs=pl.BlockSpec((tb, 1, HWp), lambda i: (i, 0, 0)),
            ),
            compiler_params=vmem_params(
                dimension_semantics=("parallel",),
                vmem_limit_bytes=32 << 20,
            ),
        )(xf)
    else:
        # ---- Chunked path: tile the channel reduction (large C * HW). ----
        max_tc = max(8, (budget_bytes // (HWp * itemsize)) // 8 * 8)
        tc = min(max_tc, _round_up(C, 8))
        Cp = _round_up(C, tc)
        if Cp != C:
            # Zero channels are sum-neutral (the kernel never divides by C).
            xf = jnp.pad(xf, ((0, 0), (0, Cp - C), (0, 0)))
        n_k = Cp // tc

        out_flat = pl.pallas_call(
            _spatial_attn_kernel_chunked,
            out_shape=jax.ShapeDtypeStruct((B, 1, HWp), x.dtype),
            grid_spec=pltpu.PrefetchScalarGridSpec(
                num_scalar_prefetch=0,
                grid=(B, n_k),
                in_specs=[pl.BlockSpec((1, tc, HWp), lambda b, k: (b, k, 0))],
                out_specs=pl.BlockSpec((1, 1, HWp), lambda b, k: (b, 0, 0)),
                scratch_shapes=[pltpu.VMEM((1, 1, HWp), jnp.float32)],
            ),
            compiler_params=vmem_params(
                dimension_semantics=("parallel", "arbitrary"),
                vmem_limit_bytes=32 << 20,
            ),
        )(xf)

    return out_flat[:, :, :HW].reshape(B, 1, H, W)


def _reference(x):
    m = jnp.mean(x, axis=1, keepdims=True)              # (B,1,H,W)
    flat = m.reshape(x.shape[0], -1)                    # (B, H*W)
    z = flat / jnp.sum(flat, axis=1, keepdims=True)     # per-sample normalize
    return z.reshape(x.shape[0], 1, x.shape[2], x.shape[3])


if __name__ == "__main__":
    # SpatialAttn has no parameters (empty __init__), only the forward compute.
    key = jax.random.PRNGKey(0)

    # Main test: lane-aligned HW, fused (single-chunk) path.
    B, C, H, W = 2, 4, 16, 16
    x = jax.random.uniform(key, (B, C, H, W), dtype=jnp.float32) + 0.1
    out = jax.block_until_ready(spatial_attn(x))
    ref = _reference(x)
    assert out.shape == (B, 1, H, W), out.shape
    assert jnp.allclose(out, ref, atol=1e-5, rtol=1e-5), "mismatch vs reference (fused)"
    assert jnp.allclose(jnp.sum(out.reshape(B, -1), axis=1), 1.0, atol=1e-5)

    # Non-lane-aligned HW (exercises the HW zero-padding path).
    B2, C2, H2, W2 = 2, 3, 5, 5
    x2 = jax.random.uniform(jax.random.PRNGKey(1), (B2, C2, H2, W2), jnp.float32) + 0.1
    out2 = jax.block_until_ready(spatial_attn(x2))
    ref2 = _reference(x2)
    assert out2.shape == (B2, 1, H2, W2), out2.shape
    assert jnp.allclose(out2, ref2, atol=1e-5, rtol=1e-5), "mismatch vs reference (padded HW)"

    # Force the chunked-channel path with a tiny budget (exercises C padding +
    # accumulator init/finalize) on the same small input.
    out3 = jax.block_until_ready(spatial_attn(x, budget_bytes=2048))
    assert jnp.allclose(out3, ref, atol=1e-5, rtol=1e-5), "mismatch vs reference (chunked)"

    print("KERNEL_OK")
</pallas_src>

<mosaic_0001>
module attributes {stable_mosaic.version = 11 : i64} {
  func.func @_spatial_attn_kernel_fused(%arg0: i32, %arg1: memref<1x4x256xf32, #tpu.memory_space<vmem>>, %arg2: memref<1x1x256xf32, #tpu.memory_space<vmem>>) attributes {dimension_semantics = [#tpu.dimension_semantics<parallel>], iteration_bounds = array<i64: 2>, scalar_prefetch = 0 : i64, scratch_operands = 0 : i64, tpu.core_type = #tpu.core_type<tc>, window_params = [{transform_indices = @transform_0, window_bounds = array<i64: 1, 4, 256>}, {transform_indices = @transform_1, window_bounds = array<i64: 1, 1, 256>}]} {
    %c0 = arith.constant 0 : index
    %c0_0 = arith.constant 0 : index
    %c0_1 = arith.constant 0 : index
    %0 = vector.load %arg1[%c0, %c0_0, %c0_1] : memref<1x4x256xf32, #tpu.memory_space<vmem>>, vector<1x4x256xf32>
    %cst = arith.constant dense<0.000000e+00> : vector<1x256xf32>
    %1 = vector.multi_reduction <add>, %0, %cst [1] : vector<1x4x256xf32> to vector<1x256xf32>
    %2 = vector.shape_cast %1 : vector<1x256xf32> to vector<1x1x256xf32>
    %cst_2 = arith.constant dense<0.000000e+00> : vector<1x1xf32>
    %3 = vector.multi_reduction <add>, %2, %cst_2 [2] : vector<1x1x256xf32> to vector<1x1xf32>
    %4 = vector.shape_cast %3 : vector<1x1xf32> to vector<1x1x1xf32>
    %5 = tpu.reciprocal %4 : vector<1x1x1xf32> -> vector<1x1x1xf32>
    %6 = vector.broadcast %5 : vector<1x1x1xf32> to vector<1x1x256xf32>
    %7 = arith.mulf %2, %6 : vector<1x1x256xf32>
    %c0_3 = arith.constant 0 : index
    %c0_4 = arith.constant 0 : index
    %c0_5 = arith.constant 0 : index
    %8 = vector.load %arg2[%c0_3, %c0_4, %c0_5] : memref<1x1x256xf32, #tpu.memory_space<vmem>>, vector<1x1x256xf32>
    tpu.vector_store %arg2[%c0_3, %c0_4, %c0_5], %7 {strides = array<i32>} : memref<1x1x256xf32, #tpu.memory_space<vmem>>, vector<1x1x256xf32>,
    return
  }
  func.func @transform_0(%arg0: i32) -> (i32, i32, i32) {
    %c0_i32 = arith.constant 0 : i32
    %c0_i32_0 = arith.constant 0 : i32
    %c0_i32_1 = arith.constant 0 : i32
    return %arg0, %c0_i32, %c0_i32_0 : i32, i32, i32
  }
  func.func @transform_1(%arg0: i32) -> (i32, i32, i32) {
    %c0_i32 = arith.constant 0 : i32
    %c0_i32_0 = arith.constant 0 : i32
    %c0_i32_1 = arith.constant 0 : i32
    return %arg0, %c0_i32, %c0_i32_0 : i32, i32, i32
  }
}

</mosaic_0001>

<llo_original>
// kernel: tpu_custom_call.1
$region0: #{tpu_custom_call.1}
  #allocation0 [shape = 'u32[]', space=smem, size = 0x4, offset = 0x4, fixed_abs, tag = 'smem constant byte address 0x4 - core index']
  #allocation1 [shape = 'u32[72,128]{1,0:T(1,128)}', space=vmem, size = 0x9000, scoped, tag = 'internal scratch']
  %s0 = inlined_call_operand.hbm [shape: f32[2,4,256], index: 0, kind: input, shape index: {}]
  %s1 = inlined_call_operand.hbm [shape: f32[2,1,256], index: 1, kind: output, shape index: {}]
  %s2 = sld [smem:[#allocation0]]
  $region41: #{tpu_custom_call.1} parent=0
    _
  %s4 = ssub.s32 1, %s2
  %s5 = scalar_select 0, %s4, %s2
  $region1: #{tpu_custom_call.1} parent=0
    #allocation2 [shape = 'u8[8192]{0}', space=vmem, size = 0x2000, scoped, tag = 'input window, operand 0']
    #allocation3 [shape = 's32[2]{0}', space=sflag, size = 0x8, scoped, tag = 'scoped memory for tpu_custom_call.1']
    #allocation4 [shape = 's32[2]{0}', space=sflag, size = 0x8, scoped, tag = 'scoped memory for tpu_custom_call.1']
    #allocation5 [shape = 'u8[2048]{0}', space=vmem, size = 0x800, scoped, tag = 'output window, operand 0']
    %6 = vsyncpa [#allocation3], 0
    %s7 = scalar_lea.sflag [#allocation3], 1
    %8 = vsyncpa %s7, 0
    %9 = vsyncpa [#allocation4], 0
    %s10 = scalar_lea.sflag [#allocation4], 1
    %11 = vsyncpa %s10, 0
    loop: start=0, step=1, limit=4
    $region2: #{tpu_custom_call.1} parent=1 // loop_pre_header
      _
    $region3: #{tpu_custom_call.1} parent=1 // loop_header
      %s13 = sphi 0, %s17
      %p14 = scmp.ge.s32.totalorder %s13, 4
      %s23 = sphi 0, %s25
      %s26 = sphi 0, %s23
      %s27 = sphi 0, %s26
      %s43 = sphi 0, %s27
      %s49 = sphi 0, %s51
      %s52 = sphi 0, %s49
      %s53 = sphi 0, %s52
      %s69 = sphi 0, %s53
    $region4: #{tpu_custom_call.1} parent=1 // loop_header_branch
      %16 = sbr.rel (%p14) target = $region8
    $region5: #{tpu_custom_call.1} parent=1 // loop_body
      %s18 = ssub.s32 %s13, 1
      %s19 = ssub.s32 %s13, 2
      %s20 = sadd.s32 %s13, 1
      %s21 = ssub.s32 %s13, %s20
      %p22 = scmp.eq.s32.totalorder %s21, 0
      %s24 = sadd.s32 %s23, 1
      %s25 = scalar_select %p22, %s23, %s24
      %p28 = pneg %p22
      %p29 = scmp.eq.s32.totalorder %s13, 1
      %p30 = por %p28, %p29
      %p31 = scmp.ne.s32.totalorder %s23, %s26
      %p32 = scmp.eq.s32.totalorder %s13, 0
      %p33 = por %p31, %p32
      %p34 = scmp.ne.s32.totalorder %s23, %s26
      %p35 = scmp.eq.s32.totalorder %s18, 1
      %p36 = por %p34, %p35
      %p37 = scmp.ne.s32.totalorder %s26, %s27
      %p38 = scmp.eq.s32.totalorder %s18, 0
      %p39 = por %p37, %p38
      %p40 = scmp.ne.s32.totalorder %s26, %s27
      %p41 = scmp.eq.s32.totalorder %s19, 1
      %p42 = por %p40, %p41
      %p44 = scmp.ne.s32.totalorder %s27, %s43
      %p45 = scmp.eq.s32.totalorder %s19, 0
      %p46 = por %p44, %p45
      %s47 = ssub.s32 %s13, %s20
      %p48 = scmp.eq.s32.totalorder %s47, 0
      %s50 = sadd.s32 %s49, 1
      %s51 = scalar_select %p48, %s49, %s50
      %p54 = pneg %p48
      %p55 = scmp.eq.s32.totalorder %s13, 1
      %p56 = por %p54, %p55
      %p57 = scmp.ne.s32.totalorder %s49, %s52
      %p58 = scmp.eq.s32.totalorder %s13, 0
      %p59 = por %p57, %p58
      %p60 = scmp.ne.s32.totalorder %s49, %s52
      %p61 = scmp.eq.s32.totalorder %s18, 1
      %p62 = por %p60, %p61
      %p63 = scmp.ne.s32.totalorder %s52, %s53
      %p64 = scmp.eq.s32.totalorder %s18, 0
      %p65 = por %p63, %p64
      %p66 = scmp.ne.s32.totalorder %s52, %s53
      %p67 = scmp.eq.s32.totalorder %s19, 1
      %p68 = por %p66, %p67
      %p70 = scmp.ne.s32.totalorder %s53, %s69
      %p71 = scmp.eq.s32.totalorder %s19, 0
      %p72 = por %p70, %p71
      %p73 = scmp.le.s32.totalorder 1, %s13
      %p74 = scmp.lt.s32.totalorder %s13, 3
      %p75 = pnand %p73, %p74
      %p76 = pneg %p75
      // Predicated region
      $region9: #{tpu_custom_call.1} parent=5 // pred_check
        _
      $region10: #{tpu_custom_call.1} parent=5 // pred_check_branch
        %78 = sbr.rel (%p75) target = $region12
      $region11: #{tpu_custom_call.1} parent=5 // pred_region
        %s79 = ssub.s32 %s13, 1
      $region12: #{tpu_custom_call.1} parent=5 // pred_fallthru
        _
      %p80 = scmp.lt.s32.totalorder %s13, 2
      // Predicated region
      $region13: #{tpu_custom_call.1} parent=5 // pred_check
        %p81 = pneg %p80
      $region14: #{tpu_custom_call.1} parent=5 // pred_check_branch
        %83 = sbr.rel (%p81) target = $region16
      $region15: #{tpu_custom_call.1} parent=5 // pred_region
        // Predicated region
        $region17: #{tpu_custom_call.1} parent=15 // pred_check
          %p84 = pneg %p33
        $region18: #{tpu_custom_call.1} parent=15 // pred_check_branch
          %86 = sbr.rel (%p84) target = $region20
        $region19: #{tpu_custom_call.1} parent=15 // pred_region
          %s87 = sand.u32 %s23, 1
          %s88 = scalar_lea.sflag [#allocation3], %s87
          %s89 = sand.u32 %s23, 1
          %s90 = smul.addr %s89, 8
          %s91 = scalar_lea.vmem [#allocation2], %s90
          %93 = vsyncadd %s88, 0
          %s94 = smul.addr %s13, 2
          %s95 = smul.addr %s94, 4
          %s96 = scalar_lea.hbm %s0, %s95
          %s98 = sshll.u32 %s96, 4
          %s99 = int_to_ptr.hbm [resolvable:$true] %s98
          %s100 = sshll.u32 %s91, 4
          %s101 = int_to_ptr.vmem [resolvable:$true] %s100
          %103 = dma.hbm_to_vmem [thread:$0]  %s99, 128, %s101, %s88
        $region20: #{tpu_custom_call.1} parent=15 // pred_fallthru
          _
      $region16: #{tpu_custom_call.1} parent=5 // pred_fallthru
        _
      %p104 = scmp.le.s32.totalorder 1, %s13
      %p105 = scmp.lt.s32.totalorder %s13, 3
      %p106 = pnand %p104, %p105
      %p107 = pneg %p106
      // Predicated region
      $region21: #{tpu_custom_call.1} parent=5 // pred_check
        _
      $region22: #{tpu_custom_call.1} parent=5 // pred_check_branch
        %109 = sbr.rel (%p106) target = $region24
      $region23: #{tpu_custom_call.1} parent=5 // pred_region
        %s110 = ssub.s32 %s13, 1
        %s111 = sand.u32 %s26, 1
        %s112 = scalar_lea.sflag [#allocation3], %s111
        %s113 = sand.u32 %s26, 1
        %s114 = smul.addr %s113, 8
        %s115 = scalar_lea.vmem [#allocation2], %s114
        // Predicated region
        $region25: #{tpu_custom_call.1} parent=23 // pred_check
          %p116 = pneg %p39
        $region26: #{tpu_custom_call.1} parent=23 // pred_check_branch
          %118 = sbr.rel (%p116) target = $region28
        $region27: #{tpu_custom_call.1} parent=23 // pred_region
          %120 = dma.done %s112, 128
        $region28: #{tpu_custom_call.1} parent=23 // pred_fallthru
          _
        %s121 = sand.u32 %s26, 1
        %s122 = scalar_lea.sflag [#allocation3], %s121
        %s123 = sand.u32 %s26, 1
        %s124 = smul.addr %s123, 8
        %s125 = scalar_lea.vmem [#allocation2], %s124
        %p126 = pneg %p39
        %p127 = pneg %p36
        %p128 = pneg %p65
        %p129 = pneg %p62
        %s130 = sand.u32 %s52, 1
        %s131 = scalar_lea.sflag [#allocation4], %s130
        %s132 = sand.u32 %s52, 1
        %s133 = smul.addr %s132, 2
        %s134 = scalar_lea.vmem [#allocation5], %s133
        %v135 = vld [vmem:[%s115] sm:$0xff]
        %137 = vst [vmem:[#allocation1] ss:$2 sm:$0xff] %v135
        %v138 = vld.sshfl [vmem:[#allocation1] sm:$0xff pattern:$0x75316420]
        %v139 = vld.sshfl [vmem:[#allocation1 + $0x8] sm:$0xff pattern:$0x75316420]
        %vm142 = vcmask 1043456
        %v143 = vsel %vm142, %v138, 0.0
        %v144 = vrot.slane %v143, 4
        %v145 = vadd.f32 %v143, %v144
        %v146 = vrot.slane %v145, 2
        %v147 = vadd.f32 %v145, %v146
        %v148 = vrot.slane %v147, 1
        %v149 = vadd.f32 %v147, %v148
        %v150 = vsel %vm142, %v139, 0.0
        %v151 = vrot.slane %v150, 4
        %v152 = vadd.f32 %v150, %v151
        %v153 = vrot.slane %v152, 2
        %v154 = vadd.f32 %v152, %v153
        %v155 = vrot.slane %v154, 1
        %v156 = vadd.f32 %v154, %v155
        %v157 = vadd.f32 %v149, %v156
        %158 = vadd.xlane.f32.xlu0 %v157
        %v159 = vpop.xlane.xlu0 %158
        %v160 = vrcp.pop %v159
        %v161 = vmul.f32 %v159, %v160
        %v162 = vsub.f32 1.0, %v161
        %v163 = vmul.f32 %v160, %v162
        %v164 = vadd.f32 %v160, %v163
        %vm165 = vweird.f32 %v159
        %vm166 = vweird.f32 %v160
        %vm167 = vmor %vm165, %vm166
        %v168 = vsel %vm167, %v160, %v164
        %v169 = vand.u32 2147483647, %v159
        %vm170 = vcmp.eq.f32.partialorder %v169, 8.507059e+37
        %v171 = vand.u32 %v159, 2147483648
        %v172 = vor.u32 1.1754944e-38, %v171
        %v173 = vsel %vm170, %v172, %v168
        %v174 = vmul.f32 %v149, %v173
        %v175 = vmul.f32 %v156, %v173
        %v178 = vrot.slane %v175, 7
        %vm179 = vcmask 1040384
        %v180 = vsel %vm179, %v174, %v178
        %v182 = vlaneseq
        %vm183 = vcmp.ge.s32.totalorder %v182, 0
        %vm184 = vcmp.lt.s32.totalorder %v182, 256
        %vm185 = vmand %vm183, %vm184
        %186 = vst.msk [vmem:[%s134] sm:$0x3] %vm185, %v180
        %s187 = sand.u32 %s52, 1
        %s188 = scalar_lea.sflag [#allocation4], %s187
        %s189 = sand.u32 %s52, 1
        %s190 = smul.addr %s189, 2
        %s191 = scalar_lea.vmem [#allocation5], %s190
        // Predicated region
        $region29: #{tpu_custom_call.1} parent=23 // pred_check
          %p192 = pneg %p62
        $region30: #{tpu_custom_call.1} parent=23 // pred_check_branch
          %194 = sbr.rel (%p192) target = $region32
        $region31: #{tpu_custom_call.1} parent=23 // pred_region
          %196 = vsyncadd %s188, 0
          %s197 = smul.addr %s18, 2
          %s198 = scalar_lea.hbm %s1, %s197
          %s200 = sshll.u32 %s191, 4
          %s201 = int_to_ptr.vmem [resolvable:$true] %s200
          %s202 = sshll.u32 %s198, 4
          %s203 = int_to_ptr.hbm [resolvable:$true] %s202
          %205 = dma.vmem_to_hbm [thread:$0]  %s201, 32, %s203, %s188
        $region32: #{tpu_custom_call.1} parent=23 // pred_fallthru
          _
      $region24: #{tpu_custom_call.1} parent=5 // pred_fallthru
        _
      %p206 = scmp.le.s32.totalorder 2, %s13
      // Predicated region
      $region33: #{tpu_custom_call.1} parent=5 // pred_check
        %p207 = pneg %p206
      $region34: #{tpu_custom_call.1} parent=5 // pred_check_branch
        %209 = sbr.rel (%p207) target = $region36
      $region35: #{tpu_custom_call.1} parent=5 // pred_region
        %s210 = ssub.s32 %s13, 2
        // Predicated region
        $region37: #{tpu_custom_call.1} parent=35 // pred_check
          %p211 = pneg %p68
        $region38: #{tpu_custom_call.1} parent=35 // pred_check_branch
          %213 = sbr.rel (%p211) target = $region40
        $region39: #{tpu_custom_call.1} parent=35 // pred_region
          %s214 = sand.u32 %s53, 1
          %s215 = scalar_lea.sflag [#allocation4], %s214
          %s216 = sand.u32 %s53, 1
          %s217 = smul.addr %s216, 2
          %s218 = scalar_lea.vmem [#allocation5], %s217
          %220 = dma.done %s215, 32
        $region40: #{tpu_custom_call.1} parent=35 // pred_fallthru
          _
      $region36: #{tpu_custom_call.1} parent=5 // pred_fallthru
        _
    $region6: #{tpu_custom_call.1} parent=1 // loop_footer
      %s17 = sadd.s32 1, %s13
    $region7: #{tpu_custom_call.1} parent=1 // loop_footer_branch
      %12 = sbr.rel target = $region3
    $region8: #{tpu_custom_call.1} parent=1 // loop_exit
      _
    %221 = vsyncpa [#allocation3], 1
    %s222 = scalar_lea.sflag [#allocation3], 1
    %223 = vsyncpa %s222, 1
    %224 = vsyncpa [#allocation4], 1
    %s225 = scalar_lea.sflag [#allocation4], 1
    %226 = vsyncpa %s225, 1

</llo_original>
